<compile_context>
chip_gen: v5e
topology: v5e:2x2
jax: 0.10.0
libtpu: 0.0.40
codegen_flags: <defaults>
</compile_context>

<pallas_src>
import math

import jax
import jax.numpy as jnp
from jax.experimental import pallas as pl
from jax.experimental.pallas import tpu as pltpu


def _round_up(x, m):
    return ((x + m - 1) // m) * m


def _vmem_capacity_bytes():
    """Per-core VMEM capacity; falls back to the v7x minimum (64 MiB)."""
    try:
        info = pltpu.get_tpu_info()
        cap = getattr(info, "vmem_capacity_bytes", None)
        if cap:
            return int(cap)
    except Exception:
        pass
    return 64 * 1024 * 1024


def _vmem_bytes(tile, in_f, hid):
    """Lane/sublane-padded VMEM footprint estimate for one grid step.

    f32 VMEM tiles pad the last dim to a multiple of 128 lanes and the
    second-to-last to a multiple of 8 sublanes.
    """
    lane, sub = 128, 8
    in_pad = _round_up(max(in_f, 1), lane)
    hid_pad = _round_up(max(hid, 1), lane)
    adj_buf = 2 * tile * in_pad * 4                       # double-buffered adj tile
    interm = 4 * tile * hid_pad * 4                       # h1 / h2 / prod + headroom
    out_buf = 2 * sub * tile * 4                          # (1, tile) -> (8, tile)
    weights = 2 * 4 * (_round_up(in_f, sub) * hid_pad     # W1 (double-buffered)
                       + _round_up(hid, sub) * hid_pad    # W2
                       + 3 * sub * hid_pad)               # b1, b2, w3 rows
    return adj_buf + interm + out_buf + weights


def _pick_tile(n, in_f, hid, tile_m, vmem_cap):
    """Largest 128-granular row tile that fits the padded-footprint budget."""
    budget = max(8 * 1024 * 1024, int(0.45 * vmem_cap))
    tile = max(128, (min(tile_m, _round_up(n, 128)) // 128) * 128)
    while tile > 128 and _vmem_bytes(tile, in_f, hid) > budget:
        tile -= 128
    # Keep >= 2 grid steps when there's enough work so the "parallel" row
    # axis shards across both TensorCores (v7x megacore).
    if n > 256 and pl.cdiv(n, tile) < 2:
        tile = max(128, _round_up(pl.cdiv(n, 2), 128))
    return tile


def _mlp_kernel(x_ref, w1_ref, b1_ref, w2_ref, b2_ref, w3_ref, b3_ref, o_ref):
    x = x_ref[...]                                       # (tile_m, in_f)
    h1 = jnp.dot(x, w1_ref[...], preferred_element_type=jnp.float32) + b1_ref[...]
    h1 = jnp.maximum(h1, 0.0)                            # relu(linear1)
    h2 = jnp.dot(h1, w2_ref[...], preferred_element_type=jnp.float32) + b2_ref[...]
    h2 = jnp.maximum(h2, 0.0)                            # relu(linear2)
    # Layer 3 (hidden -> 1): VPU multiply + lane reduction against the W3 row.
    prod = h2 * w3_ref[...]                              # (tile_m, hid)
    h3 = jnp.sum(prod, axis=-1) + b3_ref[0, 0]           # (tile_m,)
    h3 = jnp.maximum(h3, 0.0)                            # relu(linear3)
    o_ref[...] = h3[None, :].astype(o_ref.dtype)         # lane-dense (1, tile_m)


def sanbet_layer_init_forward(adj, params, *, tile_m=8192):
    """Fused eval-mode forward.  adj: (N, input_features) float32 -> (N, 1)."""
    w1, b1, w2, b2, w3, b3 = params
    n, in_f = adj.shape
    hid = w1.shape[1]

    vmem_cap = _vmem_capacity_bytes()
    tile = _pick_tile(n, in_f, hid, tile_m, vmem_cap)

    n_tiles = pl.cdiv(n, tile)
    n_pad = n_tiles * tile          # only the output is rounded up; adj is NOT padded

    vmem_needed = _vmem_bytes(tile, in_f, hid)
    vmem_limit = int(min(max(int(1.5 * vmem_needed), 32 * 1024 * 1024),
                         int(0.75 * vmem_cap)))

    # Advisory cost hint for XLA's scheduler around the custom call.
    flops = 2 * n * (in_f * hid + hid * hid + hid)
    bytes_accessed = (n * in_f * 4
                      + (in_f * hid + hid * hid + 3 * hid + 1) * 4
                      + n * 4)
    cost = pl.CostEstimate(flops=flops, transcendentals=0,
                           bytes_accessed=bytes_accessed)

    full = lambda i: (0, 0)  # weights/biases are whole and resident every step

    out_row = pl.pallas_call(
        _mlp_kernel,
        out_shape=jax.ShapeDtypeStruct((1, n_pad), jnp.float32),
        grid_spec=pltpu.PrefetchScalarGridSpec(
            num_scalar_prefetch=0,
            grid=(n_tiles,),
            in_specs=[
                pl.BlockSpec((tile, in_f), lambda i: (i, 0)),    # adj rows (streamed)
                pl.BlockSpec((in_f, hid), full),                 # W1 (in, hid)
                pl.BlockSpec((1, hid), full),                    # b1
                pl.BlockSpec((hid, hid), full),                  # W2
                pl.BlockSpec((1, hid), full),                    # b2
                pl.BlockSpec((1, hid), full),                    # W3 as a row
                pl.BlockSpec(memory_space=pltpu.MemorySpace.SMEM),  # b3 scalar
            ],
            out_specs=pl.BlockSpec((1, tile), lambda i: (0, i)),    # lane-dense slab
        ),
        compiler_params=pltpu.CompilerParams(
            dimension_semantics=("parallel",),
            vmem_limit_bytes=vmem_limit,
        ),
        cost_estimate=cost,
    )(adj, w1, b1, w2, b2, w3, b3)

    return out_row.reshape(n_pad, 1)[:n]


def init_params(key, input_features, hidden_features):
    """PyTorch-style Linear init: U(-1/sqrt(fan_in), 1/sqrt(fan_in)).

    W1/W2 are stored transposed (in, out) so the kernel computes x @ W + b;
    W3 is stored as a (1, hidden) row (same layout as PyTorch's weight).
    """
    ks = jax.random.split(key, 6)

    def uni(k, shape, fan_in):
        bound = 1.0 / math.sqrt(fan_in)
        return jax.random.uniform(k, shape, jnp.float32, -bound, bound)

    w1 = uni(ks[0], (input_features, hidden_features), input_features)
    b1 = uni(ks[1], (1, hidden_features), input_features)
    w2 = uni(ks[2], (hidden_features, hidden_features), hidden_features)
    b2 = uni(ks[3], (1, hidden_features), hidden_features)
    w3 = uni(ks[4], (1, hidden_features), hidden_features)   # row form
    b3 = uni(ks[5], (1, 1), hidden_features)
    return (w1, b1, w2, b2, w3, b3)


def _reference(adj, params):
    w1, b1, w2, b2, w3, b3 = params
    h = jax.nn.relu(adj @ w1 + b1)
    h = jax.nn.relu(h @ w2 + b2)
    return jax.nn.relu(h @ w3.T + b3)


if __name__ == "__main__":
    key = jax.random.PRNGKey(0)
    k_x, k_x2, k_p = jax.random.split(key, 3)

    input_features, hidden_features = 16, 32
    params = init_params(k_p, input_features, hidden_features)

    # Case 1: small, single-tile problem.
    N1 = 64
    adj1 = jax.random.normal(k_x, (N1, input_features), jnp.float32)
    out1 = jax.block_until_ready(sanbet_layer_init_forward(adj1, params))
    ref1 = _reference(adj1, params)
    assert out1.shape == (N1, 1)
    assert jnp.allclose(out1, ref1, atol=1e-5, rtol=1e-5), "mismatch (N=64)"

    # Case 2: non-tile-aligned N exercising the no-pad / partial-block path
    # and the >=2-tile (dual TensorCore) split.
    N2 = 300
    adj2 = jax.random.normal(k_x2, (N2, input_features), jnp.float32)
    out2 = jax.block_until_ready(sanbet_layer_init_forward(adj2, params))
    ref2 = _reference(adj2, params)
    assert out2.shape == (N2, 1)
    assert jnp.allclose(out2, ref2, atol=1e-5, rtol=1e-5), "mismatch (N=300)"

    print("KERNEL_OK")
</pallas_src>

<mosaic_0001>
module attributes {stable_mosaic.version = 11 : i64} {
  func.func @_mlp_kernel(%arg0: i32, %arg1: memref<128x16xf32, #tpu.memory_space<vmem>>, %arg2: memref<16x32xf32, #tpu.memory_space<vmem>>, %arg3: memref<1x32xf32, #tpu.memory_space<vmem>>, %arg4: memref<32x32xf32, #tpu.memory_space<vmem>>, %arg5: memref<1x32xf32, #tpu.memory_space<vmem>>, %arg6: memref<1x32xf32, #tpu.memory_space<vmem>>, %arg7: memref<1x1xf32, #tpu.memory_space<smem>>, %arg8: memref<1x128xf32, #tpu.memory_space<vmem>>) attributes {dimension_semantics = [#tpu.dimension_semantics<parallel>], iteration_bounds = array<i64: 1>, scalar_prefetch = 0 : i64, scratch_operands = 0 : i64, tpu.core_type = #tpu.core_type<tc>, window_params = [{transform_indices = @transform_0, window_bounds = array<i64: 128, 16>}, {pipeline_mode = #tpu.pipeline_mode<synchronous>, transform_indices = @transform_1, window_bounds = array<i64: 16, 32>}, {pipeline_mode = #tpu.pipeline_mode<synchronous>, transform_indices = @transform_2, window_bounds = array<i64: 1, 32>}, {pipeline_mode = #tpu.pipeline_mode<synchronous>, transform_indices = @transform_3, window_bounds = array<i64: 32, 32>}, {pipeline_mode = #tpu.pipeline_mode<synchronous>, transform_indices = @transform_4, window_bounds = array<i64: 1, 32>}, {pipeline_mode = #tpu.pipeline_mode<synchronous>, transform_indices = @transform_5, window_bounds = array<i64: 1, 32>}, {transform_indices = @transform_6, window_bounds = array<i64: 1, 1>}, {transform_indices = @transform_7, window_bounds = array<i64: 1, 128>}]} {
    %c0 = arith.constant 0 : index
    %c0_0 = arith.constant 0 : index
    %0 = vector.load %arg1[%c0, %c0_0] : memref<128x16xf32, #tpu.memory_space<vmem>>, vector<128x16xf32>
    %c0_1 = arith.constant 0 : index
    %c0_2 = arith.constant 0 : index
    %1 = vector.load %arg2[%c0_1, %c0_2] : memref<16x32xf32, #tpu.memory_space<vmem>>, vector<16x32xf32>
    %cst = arith.constant dense<0.000000e+00> : vector<128x32xf32>
    %2 = tpu.matmul %0, %1, %cst {dimension_numbers = #tpu.dot_dimension_numbers<[1], [0], [0], [1], [0, 0, 1, 1], [], []>} : vector<128x16xf32>, vector<16x32xf32>, vector<128x32xf32> -> vector<128x32xf32>
    %c0_3 = arith.constant 0 : index
    %c0_4 = arith.constant 0 : index
    %3 = vector.load %arg3[%c0_3, %c0_4] : memref<1x32xf32, #tpu.memory_space<vmem>>, vector<1x32xf32>
    %4 = vector.broadcast %3 : vector<1x32xf32> to vector<128x32xf32>
    %5 = arith.addf %2, %4 : vector<128x32xf32>
    %cst_5 = arith.constant 0.000000e+00 : f32
    %6 = vector.broadcast %cst_5 : f32 to vector<128x32xf32>
    %7 = arith.maximumf %5, %6 : vector<128x32xf32>
    %c0_6 = arith.constant 0 : index
    %c0_7 = arith.constant 0 : index
    %8 = vector.load %arg4[%c0_6, %c0_7] : memref<32x32xf32, #tpu.memory_space<vmem>>, vector<32x32xf32>
    %cst_8 = arith.constant dense<0.000000e+00> : vector<128x32xf32>
    %9 = tpu.matmul %7, %8, %cst_8 {dimension_numbers = #tpu.dot_dimension_numbers<[1], [0], [0], [1], [0, 0, 1, 1], [], []>} : vector<128x32xf32>, vector<32x32xf32>, vector<128x32xf32> -> vector<128x32xf32>
    %c0_9 = arith.constant 0 : index
    %c0_10 = arith.constant 0 : index
    %10 = vector.load %arg5[%c0_9, %c0_10] : memref<1x32xf32, #tpu.memory_space<vmem>>, vector<1x32xf32>
    %11 = vector.broadcast %10 : vector<1x32xf32> to vector<128x32xf32>
    %12 = arith.addf %9, %11 : vector<128x32xf32>
    %cst_11 = arith.constant 0.000000e+00 : f32
    %13 = vector.broadcast %cst_11 : f32 to vector<128x32xf32>
    %14 = arith.maximumf %12, %13 : vector<128x32xf32>
    %c0_12 = arith.constant 0 : index
    %c0_13 = arith.constant 0 : index
    %15 = vector.load %arg6[%c0_12, %c0_13] : memref<1x32xf32, #tpu.memory_space<vmem>>, vector<1x32xf32>
    %16 = vector.broadcast %15 : vector<1x32xf32> to vector<128x32xf32>
    %17 = arith.mulf %14, %16 : vector<128x32xf32>
    %cst_14 = arith.constant dense<0.000000e+00> : vector<128xf32>
    %18 = vector.multi_reduction <add>, %17, %cst_14 [1] : vector<128x32xf32> to vector<128xf32>
    %c0_15 = arith.constant 0 : index
    %c0_16 = arith.constant 0 : index
    %19 = memref.load %arg7[%c0_15, %c0_16] : memref<1x1xf32, #tpu.memory_space<smem>>
    %20 = vector.broadcast %19 : f32 to vector<128xf32>
    %21 = arith.addf %18, %20 : vector<128xf32>
    %cst_17 = arith.constant 0.000000e+00 : f32
    %22 = vector.broadcast %cst_17 : f32 to vector<128xf32>
    %23 = arith.maximumf %21, %22 : vector<128xf32>
    %24 = vector.shape_cast %23 : vector<128xf32> to vector<1x128xf32>
    %c0_18 = arith.constant 0 : index
    %c0_19 = arith.constant 0 : index
    %25 = vector.load %arg8[%c0_18, %c0_19] : memref<1x128xf32, #tpu.memory_space<vmem>>, vector<1x128xf32>
    tpu.vector_store %arg8[%c0_18, %c0_19], %24 {strides = array<i32>} : memref<1x128xf32, #tpu.memory_space<vmem>>, vector<1x128xf32>,
    return
  }
  func.func @transform_0(%arg0: i32) -> (i32, i32) {
    %c0_i32 = arith.constant 0 : i32
    %c0_i32_0 = arith.constant 0 : i32
    return %arg0, %c0_i32 : i32, i32
  }
  func.func @transform_1(%arg0: i32) -> (i32, i32) {
    %c0_i32 = arith.constant 0 : i32
    %c0_i32_0 = arith.constant 0 : i32
    %c0_i32_1 = arith.constant 0 : i32
    return %c0_i32, %c0_i32_0 : i32, i32
  }
  func.func @transform_2(%arg0: i32) -> (i32, i32) {
    %c0_i32 = arith.constant 0 : i32
    %c0_i32_0 = arith.constant 0 : i32
    %c0_i32_1 = arith.constant 0 : i32
    return %c0_i32, %c0_i32_0 : i32, i32
  }
  func.func @transform_3(%arg0: i32) -> (i32, i32) {
    %c0_i32 = arith.constant 0 : i32
    %c0_i32_0 = arith.constant 0 : i32
    %c0_i32_1 = arith.constant 0 : i32
    return %c0_i32, %c0_i32_0 : i32, i32
  }
  func.func @transform_4(%arg0: i32) -> (i32, i32) {
    %c0_i32 = arith.constant 0 : i32
    %c0_i32_0 = arith.constant 0 : i32
    %c0_i32_1 = arith.constant 0 : i32
    return %c0_i32, %c0_i32_0 : i32, i32
  }
  func.func @transform_5(%arg0: i32) -> (i32, i32) {
    %c0_i32 = arith.constant 0 : i32
    %c0_i32_0 = arith.constant 0 : i32
    %c0_i32_1 = arith.constant 0 : i32
    return %c0_i32, %c0_i32_0 : i32, i32
  }
  func.func @transform_6(%arg0: i32) -> (i32, i32) {
    %c0_i32 = arith.constant 0 : i32
    %c0_i32_0 = arith.constant 0 : i32
    %c0_i32_1 = arith.constant 0 : i32
    return %c0_i32, %c0_i32_0 : i32, i32
  }
  func.func @transform_7(%arg0: i32) -> (i32, i32) {
    %c0_i32 = arith.constant 0 : i32
    %c0_i32_0 = arith.constant 0 : i32
    return %c0_i32, %arg0 : i32, i32
  }
}

</mosaic_0001>

<llo_original>
// kernel: tpu_custom_call.1
$region0: #{tpu_custom_call.1}
  #allocation0 [shape = 'u32[]', space=smem, size = 0x4, offset = 0x4, fixed_abs, tag = 'smem constant byte address 0x4 - core index']
  #allocation1 [shape = 'u32[72,128]{1,0:T(1,128)}', space=vmem, size = 0x9000, scoped, tag = 'internal scratch']
  #allocation2 [shape = 'f32[1,1]{1,0:T(1,128)S(6)}', space=smem, size = 0x200, scoped, tag = 'scoped memory for tpu_custom_call.1']
  %s0 = inlined_call_operand.vmem [shape: f32[64,16], index: 0, kind: input, shape index: {}]
  %s1 = inlined_call_operand.vmem [shape: f32[16,32], index: 1, kind: input, shape index: {}]
  %s2 = inlined_call_operand.vmem [shape: f32[1,32], index: 2, kind: input, shape index: {}]
  %s3 = inlined_call_operand.vmem [shape: f32[32,32], index: 3, kind: input, shape index: {}]
  %s4 = inlined_call_operand.vmem [shape: f32[1,32], index: 4, kind: input, shape index: {}]
  %s5 = inlined_call_operand.vmem [shape: f32[1,32], index: 5, kind: input, shape index: {}]
  %s6 = inlined_call_operand.<no memory space> [shape: f32[1,1], index: 6, kind: input, shape index: {}]
  %s7 = inlined_call_operand.hbm [shape: f32[1,128], index: 7, kind: output, shape index: {}]
  %s8 = sld [smem:[#allocation0]]
  $region38: #{tpu_custom_call.1} parent=0
    _
  %s10 = ssub.s32 1, %s8
  %s11 = scalar_select 0, %s10, %s8
  %12 = sst [smem:[#allocation2]] %s6
  $region1: #{tpu_custom_call.1} parent=0
    #allocation3 [shape = 'u8[512]{0}', space=vmem, size = 0x400, scoped, tag = 'output window, operand 0, single buffered']
    #allocation4 [shape = 's32[1]{0}', space=sflag, size = 0x4, scoped, tag = 'scoped memory for tpu_custom_call.1']
    %13 = vsyncpa [#allocation4], 0
    // Predicated region
    $region2: #{tpu_custom_call.1} parent=1 // pred_check
      _
    $region3: #{tpu_custom_call.1} parent=1 // pred_check_branch
      %15 = sbr.rel (0) target = $region5
    $region4: #{tpu_custom_call.1} parent=1 // pred_region
      _
    $region5: #{tpu_custom_call.1} parent=1 // pred_fallthru
      _
    // Predicated region
    $region6: #{tpu_custom_call.1} parent=1 // pred_check
      _
    $region7: #{tpu_custom_call.1} parent=1 // pred_check_branch
      %17 = sbr.rel (0) target = $region9
    $region8: #{tpu_custom_call.1} parent=1 // pred_region
      _
    $region9: #{tpu_custom_call.1} parent=1 // pred_fallthru
      _
    // Predicated region
    $region10: #{tpu_custom_call.1} parent=1 // pred_check
      _
    $region11: #{tpu_custom_call.1} parent=1 // pred_check_branch
      %19 = sbr.rel (0) target = $region13
    $region12: #{tpu_custom_call.1} parent=1 // pred_region
      _
    $region13: #{tpu_custom_call.1} parent=1 // pred_fallthru
      _
    // Predicated region
    $region14: #{tpu_custom_call.1} parent=1 // pred_check
      _
    $region15: #{tpu_custom_call.1} parent=1 // pred_check_branch
      %21 = sbr.rel (0) target = $region17
    $region16: #{tpu_custom_call.1} parent=1 // pred_region
      _
    $region17: #{tpu_custom_call.1} parent=1 // pred_fallthru
      _
    // Predicated region
    $region18: #{tpu_custom_call.1} parent=1 // pred_check
      _
    $region19: #{tpu_custom_call.1} parent=1 // pred_check_branch
      %23 = sbr.rel (0) target = $region21
    $region20: #{tpu_custom_call.1} parent=1 // pred_region
      _
    $region21: #{tpu_custom_call.1} parent=1 // pred_fallthru
      _
    // Predicated region
    $region22: #{tpu_custom_call.1} parent=1 // pred_check
      _
    $region23: #{tpu_custom_call.1} parent=1 // pred_check_branch
      %25 = sbr.rel (0) target = $region25
    $region24: #{tpu_custom_call.1} parent=1 // pred_region
      _
    $region25: #{tpu_custom_call.1} parent=1 // pred_fallthru
      _
    // Predicated region
    $region26: #{tpu_custom_call.1} parent=1 // pred_check
      _
    $region27: #{tpu_custom_call.1} parent=1 // pred_check_branch
      %27 = sbr.rel (0) target = $region29
    $region28: #{tpu_custom_call.1} parent=1 // pred_region
      _
    $region29: #{tpu_custom_call.1} parent=1 // pred_fallthru
      _
    %v28 = vld [vmem:[%s0] sm:$0xff]
    %v29 = vld [vmem:[%s0 + $0x8] sm:$0xff]
    %v30 = vld [vmem:[%s0 + $0x10] sm:$0xff]
    %v31 = vld [vmem:[%s0 + $0x18] sm:$0xff]
    %v32 = vld [vmem:[%s0 + $0x20] sm:$0xff]
    %v33 = vld [vmem:[%s0 + $0x28] sm:$0xff]
    %v34 = vld [vmem:[%s0 + $0x30] sm:$0xff]
    %v35 = vld [vmem:[%s0 + $0x38] sm:$0xff]
    %v36 = vld [vmem:[%s0 + $0x40] sm:$0xff]
    %v37 = vld [vmem:[%s0 + $0x48] sm:$0xff]
    %v38 = vld [vmem:[%s0 + $0x50] sm:$0xff]
    %v39 = vld [vmem:[%s0 + $0x58] sm:$0xff]
    %v40 = vld [vmem:[%s0 + $0x60] sm:$0xff]
    %v41 = vld [vmem:[%s0 + $0x68] sm:$0xff]
    %v42 = vld [vmem:[%s0 + $0x70] sm:$0xff]
    %v43 = vld [vmem:[%s0 + $0x78] sm:$0xff]
    %v44 = vld [vmem:[%s1] sm:$0xff]
    %v45 = vld [vmem:[%s1 + $0x8] sm:$0xff]
    %v46 = vld [vmem:[%s2] sm:$0x1]
    %v48 = vperm.slane %v46, 0
    %vm50 = vcmask 130048
    %v52 = vsel %vm50, %v28, 0
    %v55 = vsel %vm50, %v29, 0
    %v58 = vsel %vm50, %v30, 0
    %v61 = vsel %vm50, %v31, 0
    %v64 = vsel %vm50, %v32, 0
    %v67 = vsel %vm50, %v33, 0
    %v70 = vsel %vm50, %v34, 0
    %v73 = vsel %vm50, %v35, 0
    %v76 = vsel %vm50, %v36, 0
    %v79 = vsel %vm50, %v37, 0
    %v82 = vsel %vm50, %v38, 0
    %v85 = vsel %vm50, %v39, 0
    %v88 = vsel %vm50, %v40, 0
    %v91 = vsel %vm50, %v41, 0
    %v94 = vsel %vm50, %v42, 0
    %v97 = vsel %vm50, %v43, 0
    %99 = vmatpush.msra.mxu0 0.0
    %100 = vmatpush.msra.mxu0 0.0
    %101 = vmatpush.msra.mxu0 0.0
    %102 = vmatpush.msra.mxu0 0.0
    %103 = vmatpush.msra.mxu0 0.0
    %104 = vmatpush.msra.mxu0 0.0
    %105 = vmatpush.msra.mxu0 0.0
    %106 = vmatpush.msra.mxu0 0.0
    %107 = vmatpush.msra.mxu0 0.0
    %108 = vmatpush.msra.mxu0 0.0
    %109 = vmatpush.msra.mxu0 0.0
    %110 = vmatpush.msra.mxu0 0.0
    %111 = vmatpush.msra.mxu0 0.0
    %112 = vmatpush.msra.mxu0 0.0
    %113 = vmatpush.msra.mxu0 %v45
    %114 = vmatpush.msra.mxu0 %v44
    %115 = vmatmul.f32.gmra.mxu0 %v52
    %v116 = vpop.f32.mrf.mxu0
    %v117 = vadd.f32 %v48, %v116
    %118 = vmatmul.f32.gmra.mxu0 %v55
    %v119 = vpop.f32.mrf.mxu0
    %v120 = vadd.f32 %v48, %v119
    %121 = vmatmul.f32.gmra.mxu0 %v58
    %v122 = vpop.f32.mrf.mxu0
    %v123 = vadd.f32 %v48, %v122
    %124 = vmatmul.f32.gmra.mxu0 %v61
    %v125 = vpop.f32.mrf.mxu0
    %v126 = vadd.f32 %v48, %v125
    %127 = vmatmul.f32.gmra.mxu0 %v64
    %v128 = vpop.f32.mrf.mxu0
    %v129 = vadd.f32 %v48, %v128
    %130 = vmatmul.f32.gmra.mxu0 %v67
    %v131 = vpop.f32.mrf.mxu0
    %v132 = vadd.f32 %v48, %v131
    %133 = vmatmul.f32.gmra.mxu0 %v70
    %v134 = vpop.f32.mrf.mxu0
    %v135 = vadd.f32 %v48, %v134
    %136 = vmatmul.f32.gmra.mxu0 %v73
    %v137 = vpop.f32.mrf.mxu0
    %v138 = vadd.f32 %v48, %v137
    %139 = vmatmul.f32.gmra.mxu0 %v76
    %v140 = vpop.f32.mrf.mxu0
    %v141 = vadd.f32 %v48, %v140
    %142 = vmatmul.f32.gmra.mxu0 %v79
    %v143 = vpop.f32.mrf.mxu0
    %v144 = vadd.f32 %v48, %v143
    %145 = vmatmul.f32.gmra.mxu0 %v82
    %v146 = vpop.f32.mrf.mxu0
    %v147 = vadd.f32 %v48, %v146
    %148 = vmatmul.f32.gmra.mxu0 %v85
    %v149 = vpop.f32.mrf.mxu0
    %v150 = vadd.f32 %v48, %v149
    %151 = vmatmul.f32.gmra.mxu0 %v88
    %v152 = vpop.f32.mrf.mxu0
    %v153 = vadd.f32 %v48, %v152
    %154 = vmatmul.f32.gmra.mxu0 %v91
    %v155 = vpop.f32.mrf.mxu0
    %v156 = vadd.f32 %v48, %v155
    %157 = vmatmul.f32.gmra.mxu0 %v94
    %v158 = vpop.f32.mrf.mxu0
    %v159 = vadd.f32 %v48, %v158
    %160 = vmatmul.f32.gmra.mxu0 %v97
    %v161 = vpop.f32.mrf.mxu0
    %v162 = vadd.f32 %v48, %v161
    %163 = vdwg.mxu0
    %v164 = vmax.f32 %v117, 0.0
    %v165 = vmax.f32 %v120, 0.0
    %v166 = vmax.f32 %v123, 0.0
    %v167 = vmax.f32 %v126, 0.0
    %v168 = vmax.f32 %v129, 0.0
    %v169 = vmax.f32 %v132, 0.0
    %v170 = vmax.f32 %v135, 0.0
    %v171 = vmax.f32 %v138, 0.0
    %v172 = vmax.f32 %v141, 0.0
    %v173 = vmax.f32 %v144, 0.0
    %v174 = vmax.f32 %v147, 0.0
    %v175 = vmax.f32 %v150, 0.0
    %v176 = vmax.f32 %v153, 0.0
    %v177 = vmax.f32 %v156, 0.0
    %v178 = vmax.f32 %v159, 0.0
    %v179 = vmax.f32 %v162, 0.0
    %v180 = vld [vmem:[%s3] sm:$0xff]
    %v181 = vld [vmem:[%s3 + $0x8] sm:$0xff]
    %v182 = vld [vmem:[%s3 + $0x10] sm:$0xff]
    %v183 = vld [vmem:[%s3 + $0x18] sm:$0xff]
    %v184 = vld [vmem:[%s4] sm:$0x1]
    %v186 = vperm.slane %v184, 0
    %vm188 = vcmask 261120
    %v190 = vsel %vm188, %v164, 0
    %v193 = vsel %vm188, %v165, 0
    %v196 = vsel %vm188, %v166, 0
    %v199 = vsel %vm188, %v167, 0
    %v202 = vsel %vm188, %v168, 0
    %v205 = vsel %vm188, %v169, 0
    %v208 = vsel %vm188, %v170, 0
    %v211 = vsel %vm188, %v171, 0
    %v214 = vsel %vm188, %v172, 0
    %v217 = vsel %vm188, %v173, 0
    %v220 = vsel %vm188, %v174, 0
    %v223 = vsel %vm188, %v175, 0
    %v226 = vsel %vm188, %v176, 0
    %v229 = vsel %vm188, %v177, 0
    %v232 = vsel %vm188, %v178, 0
    %v235 = vsel %vm188, %v179, 0
    %237 = vmatpush.msra.mxu0 0.0
    %238 = vmatpush.msra.mxu0 0.0
    %239 = vmatpush.msra.mxu0 0.0
    %240 = vmatpush.msra.mxu0 0.0
    %241 = vmatpush.msra.mxu0 0.0
    %242 = vmatpush.msra.mxu0 0.0
    %243 = vmatpush.msra.mxu0 0.0
    %244 = vmatpush.msra.mxu0 0.0
    %245 = vmatpush.msra.mxu0 0.0
    %246 = vmatpush.msra.mxu0 0.0
    %247 = vmatpush.msra.mxu0 0.0
    %248 = vmatpush.msra.mxu0 0.0
    %249 = vmatpush.msra.mxu0 %v183
    %250 = vmatpush.msra.mxu0 %v182
    %251 = vmatpush.msra.mxu0 %v181
    %252 = vmatpush.msra.mxu0 %v180
    %253 = vmatmul.f32.gmra.mxu0 %v190
    %v254 = vpop.f32.mrf.mxu0
    %v255 = vadd.f32 %v186, %v254
    %256 = vmatmul.f32.gmra.mxu0 %v193
    %v257 = vpop.f32.mrf.mxu0
    %v258 = vadd.f32 %v186, %v257
    %259 = vmatmul.f32.gmra.mxu0 %v196
    %v260 = vpop.f32.mrf.mxu0
    %v261 = vadd.f32 %v186, %v260
    %262 = vmatmul.f32.gmra.mxu0 %v199
    %v263 = vpop.f32.mrf.mxu0
    %v264 = vadd.f32 %v186, %v263
    %265 = vmatmul.f32.gmra.mxu0 %v202
    %v266 = vpop.f32.mrf.mxu0
    %v267 = vadd.f32 %v186, %v266
    %268 = vmatmul.f32.gmra.mxu0 %v205
    %v269 = vpop.f32.mrf.mxu0
    %v270 = vadd.f32 %v186, %v269
    %271 = vmatmul.f32.gmra.mxu0 %v208
    %v272 = vpop.f32.mrf.mxu0
    %v273 = vadd.f32 %v186, %v272
    %274 = vmatmul.f32.gmra.mxu0 %v211
    %v275 = vpop.f32.mrf.mxu0
    %v276 = vadd.f32 %v186, %v275
    %277 = vmatmul.f32.gmra.mxu0 %v214
    %v278 = vpop.f32.mrf.mxu0
    %v279 = vadd.f32 %v186, %v278
    %280 = vmatmul.f32.gmra.mxu0 %v217
    %v281 = vpop.f32.mrf.mxu0
    %v282 = vadd.f32 %v186, %v281
    %283 = vmatmul.f32.gmra.mxu0 %v220
    %v284 = vpop.f32.mrf.mxu0
    %v285 = vadd.f32 %v186, %v284
    %286 = vmatmul.f32.gmra.mxu0 %v223
    %v287 = vpop.f32.mrf.mxu0
    %v288 = vadd.f32 %v186, %v287
    %289 = vmatmul.f32.gmra.mxu0 %v226
    %v290 = vpop.f32.mrf.mxu0
    %v291 = vadd.f32 %v186, %v290
    %292 = vmatmul.f32.gmra.mxu0 %v229
    %v293 = vpop.f32.mrf.mxu0
    %v294 = vadd.f32 %v186, %v293
    %295 = vmatmul.f32.gmra.mxu0 %v232
    %v296 = vpop.f32.mrf.mxu0
    %v297 = vadd.f32 %v186, %v296
    %298 = vmatmul.f32.gmra.mxu0 %v235
    %v299 = vpop.f32.mrf.mxu0
    %v300 = vadd.f32 %v186, %v299
    %301 = vdwg.mxu0
    %v302 = vmax.f32 %v255, 0.0
    %v303 = vmax.f32 %v258, 0.0
    %v304 = vmax.f32 %v261, 0.0
    %v305 = vmax.f32 %v264, 0.0
    %v306 = vmax.f32 %v267, 0.0
    %v307 = vmax.f32 %v270, 0.0
    %v308 = vmax.f32 %v273, 0.0
    %v309 = vmax.f32 %v276, 0.0
    %v310 = vmax.f32 %v279, 0.0
    %v311 = vmax.f32 %v282, 0.0
    %v312 = vmax.f32 %v285, 0.0
    %v313 = vmax.f32 %v288, 0.0
    %v314 = vmax.f32 %v291, 0.0
    %v315 = vmax.f32 %v294, 0.0
    %v316 = vmax.f32 %v297, 0.0
    %v317 = vmax.f32 %v300, 0.0
    %v318 = vld [vmem:[%s5] sm:$0x1]
    %v320 = vperm.slane %v318, 0
    %v322 = vmul.f32 %v302, %v320
    %v323 = vmul.f32 %v303, %v320
    %v324 = vmul.f32 %v304, %v320
    %v325 = vmul.f32 %v305, %v320
    %v326 = vmul.f32 %v306, %v320
    %v327 = vmul.f32 %v307, %v320
    %v328 = vmul.f32 %v308, %v320
    %v329 = vmul.f32 %v309, %v320
    %v330 = vmul.f32 %v310, %v320
    %v331 = vmul.f32 %v311, %v320
    %v332 = vmul.f32 %v312, %v320
    %v333 = vmul.f32 %v313, %v320
    %v334 = vmul.f32 %v314, %v320
    %v335 = vmul.f32 %v315, %v320
    %v336 = vmul.f32 %v316, %v320
    %v337 = vmul.f32 %v317, %v320
    %v338 = vsel %vm188, %v322, 0.0
    %339 = vadd.xlane.f32.xlu0 %v338
    %v340 = vpop.xlane.xlu0 %339
    %v341 = vsel %vm188, %v323, 0.0
    %342 = vadd.xlane.f32.xlu0 %v341
    %v343 = vpop.xlane.xlu0 %342
    %v344 = vsel %vm188, %v324, 0.0
    %345 = vadd.xlane.f32.xlu0 %v344
    %v346 = vpop.xlane.xlu0 %345
    %v347 = vsel %vm188, %v325, 0.0
    %348 = vadd.xlane.f32.xlu0 %v347
    %v349 = vpop.xlane.xlu0 %348
    %v350 = vsel %vm188, %v326, 0.0
    %351 = vadd.xlane.f32.xlu0 %v350
    %v352 = vpop.xlane.xlu0 %351
    %v353 = vsel %vm188, %v327, 0.0
    %354 = vadd.xlane.f32.xlu0 %v353
    %v355 = vpop.xlane.xlu0 %354
    %v356 = vsel %vm188, %v328, 0.0
    %357 = vadd.xlane.f32.xlu0 %v356
    %v358 = vpop.xlane.xlu0 %357
    %v359 = vsel %vm188, %v329, 0.0
    %360 = vadd.xlane.f32.xlu0 %v359
    %v361 = vpop.xlane.xlu0 %360
    %v362 = vsel %vm188, %v330, 0.0
    %363 = vadd.xlane.f32.xlu0 %v362
    %v364 = vpop.xlane.xlu0 %363
    %v365 = vsel %vm188, %v331, 0.0
    %366 = vadd.xlane.f32.xlu0 %v365
    %v367 = vpop.xlane.xlu0 %366
    %v368 = vsel %vm188, %v332, 0.0
    %369 = vadd.xlane.f32.xlu0 %v368
    %v370 = vpop.xlane.xlu0 %369
    %v371 = vsel %vm188, %v333, 0.0
    %372 = vadd.xlane.f32.xlu0 %v371
    %v373 = vpop.xlane.xlu0 %372
    %v374 = vsel %vm188, %v334, 0.0
    %375 = vadd.xlane.f32.xlu0 %v374
    %v376 = vpop.xlane.xlu0 %375
    %v377 = vsel %vm188, %v335, 0.0
    %378 = vadd.xlane.f32.xlu0 %v377
    %v379 = vpop.xlane.xlu0 %378
    %v380 = vsel %vm188, %v336, 0.0
    %381 = vadd.xlane.f32.xlu0 %v380
    %v382 = vpop.xlane.xlu0 %381
    %v383 = vsel %vm188, %v337, 0.0
    %384 = vadd.xlane.f32.xlu0 %v383
    %v385 = vpop.xlane.xlu0 %384
    %s386 = sld [smem:[#allocation2]]
    %v387 = vstv %s386
    %v388 = vadd.f32 %v340, %v387
    %v389 = vadd.f32 %v343, %v387
    %v390 = vadd.f32 %v346, %v387
    %v391 = vadd.f32 %v349, %v387
    %v392 = vadd.f32 %v352, %v387
    %v393 = vadd.f32 %v355, %v387
    %v394 = vadd.f32 %v358, %v387
    %v395 = vadd.f32 %v361, %v387
    %v396 = vadd.f32 %v364, %v387
    %v397 = vadd.f32 %v367, %v387
    %v398 = vadd.f32 %v370, %v387
    %v399 = vadd.f32 %v373, %v387
    %v400 = vadd.f32 %v376, %v387
    %v401 = vadd.f32 %v379, %v387
    %v402 = vadd.f32 %v382, %v387
    %v403 = vadd.f32 %v385, %v387
    %v404 = vmax.f32 %v388, 0.0
    %v405 = vmax.f32 %v389, 0.0
    %v406 = vmax.f32 %v390, 0.0
    %v407 = vmax.f32 %v391, 0.0
    %v408 = vmax.f32 %v392, 0.0
    %v409 = vmax.f32 %v393, 0.0
    %v410 = vmax.f32 %v394, 0.0
    %v411 = vmax.f32 %v395, 0.0
    %v412 = vmax.f32 %v396, 0.0
    %v413 = vmax.f32 %v397, 0.0
    %v414 = vmax.f32 %v398, 0.0
    %v415 = vmax.f32 %v399, 0.0
    %v416 = vmax.f32 %v400, 0.0
    %v417 = vmax.f32 %v401, 0.0
    %v418 = vmax.f32 %v402, 0.0
    %v419 = vmax.f32 %v403, 0.0
    %v436 = vlaneseq
    %v437 = vand.u32 %v436, 127
    %v438 = vperm.slane %v404, %v437
    %v439 = vadd.s32 %v437, 4294967288
    %v440 = vperm.slane %v405, %v439
    %vm441 = vcmask 130112
    %v442 = vsel %vm441, %v440, %v438
    %v443 = vadd.s32 %v437, 4294967280
    %v444 = vperm.slane %v406, %v443
    %vm445 = vcmask 195712
    %v446 = vsel %vm445, %v444, %v442
    %v447 = vadd.s32 %v437, 4294967272
    %v448 = vperm.slane %v407, %v447
    %vm449 = vcmask 261312
    %v450 = vsel %vm449, %v448, %v446
    %v451 = vadd.s32 %v437, 4294967264
    %v452 = vperm.slane %v408, %v451
    %vm453 = vcmask 326912
    %v454 = vsel %vm453, %v452, %v450
    %v455 = vadd.s32 %v437, 4294967256
    %v456 = vperm.slane %v409, %v455
    %vm457 = vcmask 392512
    %v458 = vsel %vm457, %v456, %v454
    %v459 = vadd.s32 %v437, 4294967248
    %v460 = vperm.slane %v410, %v459
    %vm461 = vcmask 458112
    %v462 = vsel %vm461, %v460, %v458
    %v463 = vadd.s32 %v437, 4294967240
    %v464 = vperm.slane %v411, %v463
    %vm465 = vcmask 523712
    %v466 = vsel %vm465, %v464, %v462
    %v467 = vadd.s32 %v437, 4294967232
    %v468 = vperm.slane %v412, %v467
    %vm469 = vcmask 589312
    %v470 = vsel %vm469, %v468, %v466
    %v471 = vadd.s32 %v437, 4294967224
    %v472 = vperm.slane %v413, %v471
    %vm473 = vcmask 654912
    %v474 = vsel %vm473, %v472, %v470
    %v475 = vadd.s32 %v437, 4294967216
    %v476 = vperm.slane %v414, %v475
    %vm477 = vcmask 720512
    %v478 = vsel %vm477, %v476, %v474
    %v479 = vadd.s32 %v437, 4294967208
    %v480 = vperm.slane %v415, %v479
    %vm481 = vcmask 786112
    %v482 = vsel %vm481, %v480, %v478
    %v483 = vadd.s32 %v437, 4294967200
    %v484 = vperm.slane %v416, %v483
    %vm485 = vcmask 851712
    %v486 = vsel %vm485, %v484, %v482
    %v487 = vadd.s32 %v437, 4294967192
    %v488 = vperm.slane %v417, %v487
    %vm489 = vcmask 917312
    %v490 = vsel %vm489, %v488, %v486
    %v491 = vadd.s32 %v437, 4294967184
    %v492 = vperm.slane %v418, %v491
    %vm493 = vcmask 982912
    %v494 = vsel %vm493, %v492, %v490
    %v495 = vadd.s32 %v437, 4294967176
    %v496 = vperm.slane %v419, %v495
    %vm497 = vcmask 1048512
    %v498 = vsel %vm497, %v496, %v494
    %500 = vst [vmem:[#allocation3] sm:$0x1] %v498
    // Predicated region
    $region30: #{tpu_custom_call.1} parent=1 // pred_check
      _
    $region31: #{tpu_custom_call.1} parent=1 // pred_check_branch
      %502 = sbr.rel (0) target = $region33
    $region32: #{tpu_custom_call.1} parent=1 // pred_region
      %504 = vsyncadd [#allocation4], 0
      %s506 = sshll.u32 [#allocation3], 4
      %s507 = int_to_ptr.vmem [resolvable:$true] %s506
      %s508 = sshll.u32 %s7, 4
      %s509 = int_to_ptr.hbm [resolvable:$true] %s508
      %511 = dma.vmem_to_hbm [thread:$0]  %s507, 16, %s509, [#allocation4]
    $region33: #{tpu_custom_call.1} parent=1 // pred_fallthru
      _
    // Predicated region
    $region34: #{tpu_custom_call.1} parent=1 // pred_check
      _
    $region35: #{tpu_custom_call.1} parent=1 // pred_check_branch
      %513 = sbr.rel (0) target = $region37
    $region36: #{tpu_custom_call.1} parent=1 // pred_region
      %515 = dma.done [#allocation4], 16
    $region37: #{tpu_custom_call.1} parent=1 // pred_fallthru
      _
    %516 = vsyncpa [#allocation4], 1

</llo_original>
